<compile_context>
chip_gen: v7x
topology: tpu7x:2x2x1
jax: 0.10.0
libtpu: 0.0.40
codegen_flags: <defaults>
</compile_context>

<pallas_src>
import math

import jax
import jax.numpy as jnp
from jax import lax
from jax.experimental import pallas as pl
from jax.experimental.pallas import tpu as pltpu


def lambda_init_fn(depth: int) -> float:
    depth = depth + 1
    return 0.8 - 0.6 * math.exp(-0.3 * depth)


def _attn_diff_kernel(lam_ref, xq_ref, xkv_ref,
                      wq1_ref, wq2_ref, wk1_ref, wk2_ref, wv_ref, o_ref):
    # Grid step = (batch b, query tile qi).
    xq = xq_ref[0].astype(jnp.bfloat16)      # (tq, C)
    xkv = xkv_ref[0].astype(jnp.bfloat16)    # (T,  C)

    # Projections on the MXU (bf16 in, f32 accumulate).  Scale is already
    # folded into wq1/wq2 host-side.
    q1 = jnp.dot(xq, wq1_ref[...], preferred_element_type=jnp.float32)   # (tq, H)
    q2 = jnp.dot(xq, wq2_ref[...], preferred_element_type=jnp.float32)   # (tq, H)
    k1 = jnp.dot(xkv, wk1_ref[...], preferred_element_type=jnp.float32)  # (T,  H)
    k2 = jnp.dot(xkv, wk2_ref[...], preferred_element_type=jnp.float32)  # (T,  H)
    v = jnp.dot(xkv, wv_ref[...], preferred_element_type=jnp.float32)    # (T, 2H)

    # Scores: contract last dims of both operands (no explicit K transpose).
    dn = (((1,), (1,)), ((), ()))
    w1 = lax.dot_general(q1.astype(jnp.bfloat16), k1.astype(jnp.bfloat16),
                         dn, preferred_element_type=jnp.float32)          # (tq, T)
    w2 = lax.dot_general(q2.astype(jnp.bfloat16), k2.astype(jnp.bfloat16),
                         dn, preferred_element_type=jnp.float32)          # (tq, T)

    # Causal mask, built once per tile and shared by both score matrices.
    tq = q1.shape[0]
    T = k1.shape[0]
    row0 = pl.program_id(1) * tq
    row = lax.broadcasted_iota(jnp.int32, (tq, T), 0) + row0
    col = lax.broadcasted_iota(jnp.int32, (tq, T), 1)
    causal = col <= row
    # NOTE: -inf is safe because kv is not tiled, so every row has at least
    # the diagonal unmasked.  If kv-tiling is added later, switch to a large
    # finite negative to avoid (-inf) - (-inf) = NaN on fully-masked tiles.
    neg_inf = jnp.float32(-jnp.inf)
    w1 = jnp.where(causal, w1, neg_inf)
    w2 = jnp.where(causal, w2, neg_inf)

    def _softmax(w):
        m = jnp.max(w, axis=-1, keepdims=True)
        e = jnp.exp(w - m)
        return e * pl.reciprocal(jnp.sum(e, axis=-1, keepdims=True), approx=True)

    lam = lam_ref[0, 0]                                   # scalar lambda_ (SMEM)
    attn = _softmax(w1) - lam * _softmax(w2)              # (tq, T) f32
    # Dropout: identity in eval mode.

    out = jnp.dot(attn.astype(jnp.bfloat16), v.astype(jnp.bfloat16),
                  preferred_element_type=jnp.float32)     # (tq, 2H)
    o_ref[0] = out.astype(o_ref.dtype)


def _pick_tq(T: int) -> int:
    # Largest query tile from a fixed menu that divides T; whole T otherwise.
    for cand in (512, 256, 128, 64, 32, 16, 8):
        if T % cand == 0:
            return cand
    return T


def attention_diff(x, wq, wk, wv, lambda_q1, lambda_q2, lambda_k1, lambda_k2,
                   depth):
    """x: (B, T, C) f32; wq/wk/wv: (C, 2H) f32 (transposed nn.Linear weights)."""
    B, T, C = x.shape
    two_h = wq.shape[1]
    H = two_h // 2
    tq = _pick_tq(T)
    num_q_tiles = T // tq

    # lambda_ = exp(sum(lq1*lk1)) - exp(sum(lq2*lk2)) + lambda_init  (scalar glue)
    lambda_1 = jnp.exp(jnp.sum(lambda_q1 * lambda_k1))
    lambda_2 = jnp.exp(jnp.sum(lambda_q2 * lambda_k2))
    lam = (lambda_1 - lambda_2 + lambda_init_fn(depth)).astype(jnp.float32)
    lam = lam.reshape(1, 1)

    # Host-side parameter prep: split, fold the 1/sqrt(H) scale into the query
    # weights, and cast weights to bf16 (MXU-native) once.
    scale = jnp.float32(1.0 / math.sqrt(H))
    wq1 = (wq[:, :H] * scale).astype(jnp.bfloat16)
    wq2 = (wq[:, H:] * scale).astype(jnp.bfloat16)
    wk1 = wk[:, :H].astype(jnp.bfloat16)
    wk2 = wk[:, H:].astype(jnp.bfloat16)
    wv_b = wv.astype(jnp.bfloat16)

    grid_spec = pltpu.PrefetchScalarGridSpec(
        num_scalar_prefetch=0,
        grid=(B, num_q_tiles),
        in_specs=[
            pl.BlockSpec(memory_space=pltpu.MemorySpace.SMEM),      # lambda_
            pl.BlockSpec((1, tq, C), lambda b, qi: (b, qi, 0)),     # x (q rows)
            pl.BlockSpec((1, T, C), lambda b, qi: (b, 0, 0)),       # x (k/v rows)
            pl.BlockSpec((C, H), lambda b, qi: (0, 0)),             # Wq1*scale
            pl.BlockSpec((C, H), lambda b, qi: (0, 0)),             # Wq2*scale
            pl.BlockSpec((C, H), lambda b, qi: (0, 0)),             # Wk1
            pl.BlockSpec((C, H), lambda b, qi: (0, 0)),             # Wk2
            pl.BlockSpec((C, two_h), lambda b, qi: (0, 0)),         # Wv
        ],
        out_specs=pl.BlockSpec((1, tq, two_h), lambda b, qi: (b, qi, 0)),
    )

    flops = 2 * B * (6 * T * C * H + 4 * T * T * H)
    cost = pl.CostEstimate(
        flops=int(flops),
        transcendentals=int(2 * B * T * T),
        bytes_accessed=int(4 * B * T * C + 2 * 3 * C * two_h + 4 * B * T * two_h),
    )

    return pl.pallas_call(
        _attn_diff_kernel,
        out_shape=jax.ShapeDtypeStruct((B, T, two_h), jnp.float32),
        grid_spec=grid_spec,
        compiler_params=pltpu.CompilerParams(
            dimension_semantics=("parallel", "parallel"),
            vmem_limit_bytes=32 * 1024 * 1024,
        ),
        cost_estimate=cost,
    )(lam, x, x, wq1, wq2, wk1, wk2, wv_b)


def _reference(x, wq, wk, wv, lq1, lq2, lk1, lk2, depth):
    # Pure-JAX f32 replica of the PyTorch forward (eval mode) for validation.
    q = x @ wq
    k = x @ wk
    v = x @ wv
    H = q.shape[-1] // 2
    q1, q2 = q[..., :H], q[..., H:]
    k1, k2 = k[..., :H], k[..., H:]
    T = x.shape[1]
    scale = 1.0 / math.sqrt(H)
    w1 = jnp.einsum("btd,bsd->bts", q1, k1) * scale
    w2 = jnp.einsum("btd,bsd->bts", q2, k2) * scale
    mask = jnp.tril(jnp.ones((T, T), dtype=bool))
    w1 = jnp.where(mask, w1, -jnp.inf)
    w2 = jnp.where(mask, w2, -jnp.inf)
    lam = jnp.exp(jnp.sum(lq1 * lk1)) - jnp.exp(jnp.sum(lq2 * lk2)) + lambda_init_fn(depth)
    attn = jax.nn.softmax(w1, axis=-1) - lam * jax.nn.softmax(w2, axis=-1)
    return attn @ v


if __name__ == "__main__":
    # Small config consistent with the module: d_model=32, head_size=16,
    # depth=0, batch=2, T=8.
    B, T = 2, 8
    d_model, head_size, depth = 32, 16, 0

    key = jax.random.PRNGKey(0)
    kx, kq, kk, kv, kl1, kl2, kl3, kl4 = jax.random.split(key, 8)

    x = jax.random.normal(kx, (B, T, d_model), dtype=jnp.float32)

    # nn.Linear default init ~ U(-1/sqrt(fan_in), 1/sqrt(fan_in)); stored (C, 2H).
    bound = 1.0 / math.sqrt(d_model)
    wq = jax.random.uniform(kq, (d_model, 2 * head_size), jnp.float32, -bound, bound)
    wk = jax.random.uniform(kk, (d_model, 2 * head_size), jnp.float32, -bound, bound)
    wv = jax.random.uniform(kv, (d_model, 2 * head_size), jnp.float32, -bound, bound)

    lambda_q1 = 0.1 * jax.random.normal(kl1, (head_size,), jnp.float32)
    lambda_q2 = 0.1 * jax.random.normal(kl2, (head_size,), jnp.float32)
    lambda_k1 = 0.1 * jax.random.normal(kl3, (head_size,), jnp.float32)
    lambda_k2 = 0.1 * jax.random.normal(kl4, (head_size,), jnp.float32)

    out = attention_diff(x, wq, wk, wv, lambda_q1, lambda_q2, lambda_k1,
                         lambda_k2, depth)
    out = jax.block_until_ready(out)

    ref = _reference(x, wq, wk, wv, lambda_q1, lambda_q2, lambda_k1,
                     lambda_k2, depth)
    assert out.shape == (B, T, 2 * head_size)
    # bf16 MXU operands + approx reciprocal -> loosened tolerance vs f32 ref.
    assert jnp.allclose(out, ref, atol=2e-2, rtol=2e-2), "mismatch vs reference"

    print("KERNEL_OK")
</pallas_src>

<mosaic_0001>
module attributes {stable_mosaic.version = 11 : i64} {
  func.func @_attn_diff_kernel(%arg0: i32, %arg1: i32, %arg2: memref<1x1xf32, #tpu.memory_space<smem>>, %arg3: memref<1x8x32xf32, #tpu.memory_space<vmem>>, %arg4: memref<1x8x32xf32, #tpu.memory_space<vmem>>, %arg5: memref<32x16xbf16, #tpu.memory_space<vmem>>, %arg6: memref<32x16xbf16, #tpu.memory_space<vmem>>, %arg7: memref<32x16xbf16, #tpu.memory_space<vmem>>, %arg8: memref<32x16xbf16, #tpu.memory_space<vmem>>, %arg9: memref<32x32xbf16, #tpu.memory_space<vmem>>, %arg10: memref<1x8x32xf32, #tpu.memory_space<vmem>>) attributes {dimension_semantics = [#tpu.dimension_semantics<parallel>, #tpu.dimension_semantics<parallel>], iteration_bounds = array<i64: 2, 1>, scalar_prefetch = 0 : i64, scratch_operands = 0 : i64, tpu.core_type = #tpu.core_type<tc>, window_params = [{transform_indices = @transform_0, window_bounds = array<i64: 1, 1>}, {transform_indices = @transform_1, window_bounds = array<i64: 1, 8, 32>}, {transform_indices = @transform_2, window_bounds = array<i64: 1, 8, 32>}, {pipeline_mode = #tpu.pipeline_mode<synchronous>, transform_indices = @transform_3, window_bounds = array<i64: 32, 16>}, {pipeline_mode = #tpu.pipeline_mode<synchronous>, transform_indices = @transform_4, window_bounds = array<i64: 32, 16>}, {pipeline_mode = #tpu.pipeline_mode<synchronous>, transform_indices = @transform_5, window_bounds = array<i64: 32, 16>}, {pipeline_mode = #tpu.pipeline_mode<synchronous>, transform_indices = @transform_6, window_bounds = array<i64: 32, 16>}, {pipeline_mode = #tpu.pipeline_mode<synchronous>, transform_indices = @transform_7, window_bounds = array<i64: 32, 32>}, {transform_indices = @transform_8, window_bounds = array<i64: 1, 8, 32>}]} {
    %c0 = arith.constant 0 : index
    %c0_0 = arith.constant 0 : index
    %c0_1 = arith.constant 0 : index
    %0 = vector.load %arg3[%c0, %c0_0, %c0_1] : memref<1x8x32xf32, #tpu.memory_space<vmem>>, vector<1x8x32xf32>
    %1 = vector.shape_cast %0 : vector<1x8x32xf32> to vector<8x32xf32>
    %2 = arith.truncf %1 : vector<8x32xf32> to vector<8x32xbf16>
    %c0_2 = arith.constant 0 : index
    %c0_3 = arith.constant 0 : index
    %c0_4 = arith.constant 0 : index
    %3 = vector.load %arg4[%c0_2, %c0_3, %c0_4] : memref<1x8x32xf32, #tpu.memory_space<vmem>>, vector<1x8x32xf32>
    %4 = vector.shape_cast %3 : vector<1x8x32xf32> to vector<8x32xf32>
    %5 = arith.truncf %4 : vector<8x32xf32> to vector<8x32xbf16>
    %c0_5 = arith.constant 0 : index
    %c0_6 = arith.constant 0 : index
    %6 = vector.load %arg5[%c0_5, %c0_6] : memref<32x16xbf16, #tpu.memory_space<vmem>>, vector<32x16xbf16>
    %cst = arith.constant dense<0.000000e+00> : vector<8x16xf32>
    %7 = tpu.matmul %2, %6, %cst {dimension_numbers = #tpu.dot_dimension_numbers<[1], [0], [0], [1], [0, 0, 1, 1], [], []>} : vector<8x32xbf16>, vector<32x16xbf16>, vector<8x16xf32> -> vector<8x16xf32>
    %c0_7 = arith.constant 0 : index
    %c0_8 = arith.constant 0 : index
    %8 = vector.load %arg6[%c0_7, %c0_8] : memref<32x16xbf16, #tpu.memory_space<vmem>>, vector<32x16xbf16>
    %cst_9 = arith.constant dense<0.000000e+00> : vector<8x16xf32>
    %9 = tpu.matmul %2, %8, %cst_9 {dimension_numbers = #tpu.dot_dimension_numbers<[1], [0], [0], [1], [0, 0, 1, 1], [], []>} : vector<8x32xbf16>, vector<32x16xbf16>, vector<8x16xf32> -> vector<8x16xf32>
    %c0_10 = arith.constant 0 : index
    %c0_11 = arith.constant 0 : index
    %10 = vector.load %arg7[%c0_10, %c0_11] : memref<32x16xbf16, #tpu.memory_space<vmem>>, vector<32x16xbf16>
    %cst_12 = arith.constant dense<0.000000e+00> : vector<8x16xf32>
    %11 = tpu.matmul %5, %10, %cst_12 {dimension_numbers = #tpu.dot_dimension_numbers<[1], [0], [0], [1], [0, 0, 1, 1], [], []>} : vector<8x32xbf16>, vector<32x16xbf16>, vector<8x16xf32> -> vector<8x16xf32>
    %c0_13 = arith.constant 0 : index
    %c0_14 = arith.constant 0 : index
    %12 = vector.load %arg8[%c0_13, %c0_14] : memref<32x16xbf16, #tpu.memory_space<vmem>>, vector<32x16xbf16>
    %cst_15 = arith.constant dense<0.000000e+00> : vector<8x16xf32>
    %13 = tpu.matmul %5, %12, %cst_15 {dimension_numbers = #tpu.dot_dimension_numbers<[1], [0], [0], [1], [0, 0, 1, 1], [], []>} : vector<8x32xbf16>, vector<32x16xbf16>, vector<8x16xf32> -> vector<8x16xf32>
    %c0_16 = arith.constant 0 : index
    %c0_17 = arith.constant 0 : index
    %14 = vector.load %arg9[%c0_16, %c0_17] : memref<32x32xbf16, #tpu.memory_space<vmem>>, vector<32x32xbf16>
    %cst_18 = arith.constant dense<0.000000e+00> : vector<8x32xf32>
    %15 = tpu.matmul %5, %14, %cst_18 {dimension_numbers = #tpu.dot_dimension_numbers<[1], [0], [0], [1], [0, 0, 1, 1], [], []>} : vector<8x32xbf16>, vector<32x32xbf16>, vector<8x32xf32> -> vector<8x32xf32>
    %16 = arith.truncf %7 : vector<8x16xf32> to vector<8x16xbf16>
    %17 = arith.truncf %11 : vector<8x16xf32> to vector<8x16xbf16>
    %cst_19 = arith.constant dense<0.000000e+00> : vector<8x8xf32>
    %18 = tpu.matmul %16, %17, %cst_19 {dimension_numbers = #tpu.dot_dimension_numbers<[1], [1], [0], [0], [0, 0, 1, 0], [], []>} : vector<8x16xbf16>, vector<8x16xbf16>, vector<8x8xf32> -> vector<8x8xf32>
    %19 = arith.truncf %9 : vector<8x16xf32> to vector<8x16xbf16>
    %20 = arith.truncf %13 : vector<8x16xf32> to vector<8x16xbf16>
    %cst_20 = arith.constant dense<0.000000e+00> : vector<8x8xf32>
    %21 = tpu.matmul %19, %20, %cst_20 {dimension_numbers = #tpu.dot_dimension_numbers<[1], [1], [0], [0], [0, 0, 1, 0], [], []>} : vector<8x16xbf16>, vector<8x16xbf16>, vector<8x8xf32> -> vector<8x8xf32>
    %c8_i32 = arith.constant 8 : i32
    %22 = arith.muli %arg1, %c8_i32 : i32
    %23 = tpu.iota {dimensions = array<i32: 0>} : vector<8x8xi32>
    %24 = vector.broadcast %22 : i32 to vector<8x8xi32>
    %25 = arith.addi %23, %24 : vector<8x8xi32>
    %26 = tpu.iota {dimensions = array<i32: 1>} : vector<8x8xi32>
    %27 = arith.cmpi sle, %26, %25 : vector<8x8xi32>
    %cst_21 = arith.constant 0xFF800000 : f32
    %28 = vector.broadcast %cst_21 : f32 to vector<8x8xf32>
    %29 = arith.select %27, %18, %28 : vector<8x8xi1>, vector<8x8xf32>
    %cst_22 = arith.constant 0xFF800000 : f32
    %30 = vector.broadcast %cst_22 : f32 to vector<8x8xf32>
    %31 = arith.select %27, %21, %30 : vector<8x8xi1>, vector<8x8xf32>
    %c0_23 = arith.constant 0 : index
    %c0_24 = arith.constant 0 : index
    %32 = memref.load %arg2[%c0_23, %c0_24] : memref<1x1xf32, #tpu.memory_space<smem>>
    %cst_25 = arith.constant dense<0xFF800000> : vector<8xf32>
    %33 = vector.multi_reduction <maximumf>, %29, %cst_25 [1] : vector<8x8xf32> to vector<8xf32>
    %34 = vector.shape_cast %33 : vector<8xf32> to vector<8x1xf32>
    %35 = vector.broadcast %34 : vector<8x1xf32> to vector<8x8xf32>
    %36 = arith.subf %29, %35 : vector<8x8xf32>
    %37 = math.exp %36 : vector<8x8xf32>
    %cst_26 = arith.constant dense<0.000000e+00> : vector<8xf32>
    %38 = vector.multi_reduction <add>, %37, %cst_26 [1] : vector<8x8xf32> to vector<8xf32>
    %39 = vector.shape_cast %38 : vector<8xf32> to vector<8x1xf32>
    %40 = tpu.reciprocal %39 {approx = true} : vector<8x1xf32> -> vector<8x1xf32>
    %41 = vector.broadcast %40 : vector<8x1xf32> to vector<8x8xf32>
    %42 = arith.mulf %37, %41 : vector<8x8xf32>
    %cst_27 = arith.constant dense<0xFF800000> : vector<8xf32>
    %43 = vector.multi_reduction <maximumf>, %31, %cst_27 [1] : vector<8x8xf32> to vector<8xf32>
    %44 = vector.shape_cast %43 : vector<8xf32> to vector<8x1xf32>
    %45 = vector.broadcast %44 : vector<8x1xf32> to vector<8x8xf32>
    %46 = arith.subf %31, %45 : vector<8x8xf32>
    %47 = math.exp %46 : vector<8x8xf32>
    %cst_28 = arith.constant dense<0.000000e+00> : vector<8xf32>
    %48 = vector.multi_reduction <add>, %47, %cst_28 [1] : vector<8x8xf32> to vector<8xf32>
    %49 = vector.shape_cast %48 : vector<8xf32> to vector<8x1xf32>
    %50 = tpu.reciprocal %49 {approx = true} : vector<8x1xf32> -> vector<8x1xf32>
    %51 = vector.broadcast %50 : vector<8x1xf32> to vector<8x8xf32>
    %52 = arith.mulf %47, %51 : vector<8x8xf32>
    %53 = vector.broadcast %32 : f32 to vector<8x8xf32>
    %54 = arith.mulf %53, %52 : vector<8x8xf32>
    %55 = arith.subf %42, %54 : vector<8x8xf32>
    %56 = arith.truncf %55 : vector<8x8xf32> to vector<8x8xbf16>
    %57 = arith.truncf %15 : vector<8x32xf32> to vector<8x32xbf16>
    %cst_29 = arith.constant dense<0.000000e+00> : vector<8x32xf32>
    %58 = tpu.matmul %56, %57, %cst_29 {dimension_numbers = #tpu.dot_dimension_numbers<[1], [0], [0], [1], [0, 0, 1, 1], [], []>} : vector<8x8xbf16>, vector<8x32xbf16>, vector<8x32xf32> -> vector<8x32xf32>
    %c0_30 = arith.constant 0 : index
    %c0_31 = arith.constant 0 : index
    %c0_32 = arith.constant 0 : index
    %59 = vector.load %arg10[%c0_30, %c0_31, %c0_32] : memref<1x8x32xf32, #tpu.memory_space<vmem>>, vector<1x8x32xf32>
    %60 = vector.shape_cast %59 : vector<1x8x32xf32> to vector<8x32xf32>
    %61 = vector.shape_cast %58 : vector<8x32xf32> to vector<1x8x32xf32>
    tpu.vector_store %arg10[%c0_30, %c0_31, %c0_32], %61 {strides = array<i32>} : memref<1x8x32xf32, #tpu.memory_space<vmem>>, vector<1x8x32xf32>,
    return
  }
  func.func @transform_0(%arg0: i32, %arg1: i32) -> (i32, i32) {
    %c0_i32 = arith.constant 0 : i32
    %c0_i32_0 = arith.constant 0 : i32
    %c0_i32_1 = arith.constant 0 : i32
    return %c0_i32, %c0_i32_0 : i32, i32
  }
  func.func @transform_1(%arg0: i32, %arg1: i32) -> (i32, i32, i32) {
    %c0_i32 = arith.constant 0 : i32
    %c0_i32_0 = arith.constant 0 : i32
    return %arg0, %arg1, %c0_i32 : i32, i32, i32
  }
  func.func @transform_2(%arg0: i32, %arg1: i32) -> (i32, i32, i32) {
    %c0_i32 = arith.constant 0 : i32
    %c0_i32_0 = arith.constant 0 : i32
    %c0_i32_1 = arith.constant 0 : i32
    return %arg0, %c0_i32, %c0_i32_0 : i32, i32, i32
  }
  func.func @transform_3(%arg0: i32, %arg1: i32) -> (i32, i32) {
    %c0_i32 = arith.constant 0 : i32
    %c0_i32_0 = arith.constant 0 : i32
    %c0_i32_1 = arith.constant 0 : i32
    return %c0_i32, %c0_i32_0 : i32, i32
  }
  func.func @transform_4(%arg0: i32, %arg1: i32) -> (i32, i32) {
    %c0_i32 = arith.constant 0 : i32
    %c0_i32_0 = arith.constant 0 : i32
    %c0_i32_1 = arith.constant 0 : i32
    return %c0_i32, %c0_i32_0 : i32, i32
  }
  func.func @transform_5(%arg0: i32, %arg1: i32) -> (i32, i32) {
    %c0_i32 = arith.constant 0 : i32
    %c0_i32_0 = arith.constant 0 : i32
    %c0_i32_1 = arith.constant 0 : i32
    return %c0_i32, %c0_i32_0 : i32, i32
  }
  func.func @transform_6(%arg0: i32, %arg1: i32) -> (i32, i32) {
    %c0_i32 = arith.constant 0 : i32
    %c0_i32_0 = arith.constant 0 : i32
    %c0_i32_1 = arith.constant 0 : i32
    return %c0_i32, %c0_i32_0 : i32, i32
  }
  func.func @transform_7(%arg0: i32, %arg1: i32) -> (i32, i32) {
    %c0_i32 = arith.constant 0 : i32
    %c0_i32_0 = arith.constant 0 : i32
    %c0_i32_1 = arith.constant 0 : i32
    return %c0_i32, %c0_i32_0 : i32, i32
  }
  func.func @transform_8(%arg0: i32, %arg1: i32) -> (i32, i32, i32) {
    %c0_i32 = arith.constant 0 : i32
    %c0_i32_0 = arith.constant 0 : i32
    return %arg0, %arg1, %c0_i32 : i32, i32, i32
  }
}

</mosaic_0001>

<llo_original>
// kernel: tpu_custom_call.1
$region0: #{tpu_custom_call.1}
  #allocation0 [shape = 'u32[]', space=smem, size = 0x4, offset = 0x4, fixed_abs, tag = 'smem constant byte address 0x4 - core index']
  #allocation1 [shape = 'u32[144,128]{1,0:T(1,128)}', space=vmem, size = 0x12000, scoped, tag = 'internal scratch']
  #allocation2 [shape = 'f32[1,1]{1,0:T(1,128)S(6)}', space=smem, size = 0x200, scoped, tag = 'scoped memory for tpu_custom_call.1']
  %s0 = inlined_call_operand.<no memory space> [shape: f32[1,1], index: 0, kind: input, shape index: {}]
  %s1 = inlined_call_operand.vmem [shape: f32[2,8,32], index: 1, kind: input, shape index: {}]
  %s2 = inlined_call_operand.vmem [shape: f32[2,8,32], index: 2, kind: input, shape index: {}]
  %s3 = inlined_call_operand.vmem [shape: bf16[32,16], index: 3, kind: input, shape index: {}]
  %s4 = inlined_call_operand.vmem [shape: bf16[32,16], index: 4, kind: input, shape index: {}]
  %s5 = inlined_call_operand.vmem [shape: bf16[32,16], index: 5, kind: input, shape index: {}]
  %s6 = inlined_call_operand.vmem [shape: bf16[32,16], index: 6, kind: input, shape index: {}]
  %s7 = inlined_call_operand.vmem [shape: bf16[32,32], index: 7, kind: input, shape index: {}]
  %s8 = inlined_call_operand.hbm [shape: f32[2,8,32], index: 8, kind: output, shape index: {}]
  %s9 = sld [smem:[#allocation0]]
  $region65: #{tpu_custom_call.1} parent=0
    _
  %s11 = ssub.s32 1, %s9
  %s12 = scalar_select 0, %s11, %s9
  %13 = sst [smem:[#allocation2]] %s0
  $region1: #{tpu_custom_call.1} parent=0
    #allocation3 [shape = 'u8[8192]{0}', space=vmem, size = 0x2000, scoped, tag = 'output window, operand 0']
    #allocation4 [shape = 's32[2]{0}', space=sflag, size = 0x8, scoped, tag = 'scoped memory for tpu_custom_call.1']
    %14 = vsyncpa [#allocation4], 0
    %s15 = scalar_lea.sflag [#allocation4], 1
    %16 = vsyncpa %s15, 0
    loop: start=0, step=1, limit=4
    $region2: #{tpu_custom_call.1} parent=1 // loop_pre_header
      _
    $region3: #{tpu_custom_call.1} parent=1 // loop_header
      %s18 = sphi 0, %s22
      %p19 = scmp.ge.s32.totalorder %s18, 4
      %s25 = sphi 0, %s37
      %s26 = sphi 0, %s33
      %s27 = sphi 0, %s25
      %s28 = sphi 0, %s26
      %s29 = sphi 0, %s27
      %s30 = sphi 0, %s28
      %s38 = sphi 0, %s38
      %s40 = sphi 0, %s38
      %s41 = sphi 0, %s40
      %s55 = sphi 0, %s41
      %s63 = sphi 0, %s65
      %s66 = sphi 0, %s63
      %s67 = sphi 0, %s66
      %s83 = sphi 0, %s67
      %s89 = sphi 0, %s91
      %s92 = sphi 0, %s89
      %s93 = sphi 0, %s92
      %s109 = sphi 0, %s93
      %s113 = sphi 0, %s113
      %s115 = sphi 0, %s113
      %s116 = sphi 0, %s115
      %s130 = sphi 0, %s116
      %s134 = sphi 0, %s134
      %s136 = sphi 0, %s134
      %s137 = sphi 0, %s136
      %s151 = sphi 0, %s137
      %s155 = sphi 0, %s155
      %s157 = sphi 0, %s155
      %s158 = sphi 0, %s157
      %s172 = sphi 0, %s158
      %s176 = sphi 0, %s176
      %s178 = sphi 0, %s176
      %s179 = sphi 0, %s178
      %s193 = sphi 0, %s179
      %s197 = sphi 0, %s197
      %s199 = sphi 0, %s197
      %s200 = sphi 0, %s199
      %s214 = sphi 0, %s200
      %s222 = sphi 0, %s224
      %s225 = sphi 0, %s222
      %s226 = sphi 0, %s225
      %s242 = sphi 0, %s226
    $region4: #{tpu_custom_call.1} parent=1 // loop_header_branch
      %21 = sbr.rel (%p19) target = $region8
    $region5: #{tpu_custom_call.1} parent=1 // loop_body
      %s23 = ssub.s32 %s18, 1
      %s24 = ssub.s32 %s18, 2
      %s31 = sadd.s32 1, %s26
      %p32 = scmp.ge.s32.totalorder %s31, 1
      %s33 = scalar_select %p32, 0, %s31
      %s34 = sadd.s32 1, %s25
      %s35 = scalar_select %p32, %s34, %s25
      %p36 = scmp.ge.s32.totalorder %s35, 2
      %s37 = scalar_select %p36, 0, %s35
      %s39 = sadd.s32 %s38, 1
      %p42 = scmp.eq.s32.totalorder %s18, 1
      %p43 = scmp.ne.s32.totalorder %s38, %s40
      %p44 = scmp.eq.s32.totalorder %s18, 0
      %p45 = por %p43, %p44
      %p46 = scmp.ne.s32.totalorder %s38, %s40
      %p47 = scmp.eq.s32.totalorder %s23, 1
      %p48 = por %p46, %p47
      %p49 = scmp.ne.s32.totalorder %s40, %s41
      %p50 = scmp.eq.s32.totalorder %s23, 0
      %p51 = por %p49, %p50
      %p52 = scmp.ne.s32.totalorder %s40, %s41
      %p53 = scmp.eq.s32.totalorder %s24, 1
      %p54 = por %p52, %p53
      %p56 = scmp.ne.s32.totalorder %s41, %s55
      %p57 = scmp.eq.s32.totalorder %s24, 0
      %p58 = por %p56, %p57
      %s59 = ssub.s32 %s25, %s37
      %s60 = ssub.s32 %s26, %s33
      %s61 = sor.u32 %s59, %s60
      %p62 = scmp.eq.s32.totalorder %s61, 0
      %s64 = sadd.s32 %s63, 1
      %s65 = scalar_select %p62, %s63, %s64
      %p68 = pneg %p62
      %p69 = scmp.eq.s32.totalorder %s18, 1
      %p70 = por %p68, %p69
      %p71 = scmp.ne.s32.totalorder %s63, %s66
      %p72 = scmp.eq.s32.totalorder %s18, 0
      %p73 = por %p71, %p72
      %p74 = scmp.ne.s32.totalorder %s63, %s66
      %p75 = scmp.eq.s32.totalorder %s23, 1
      %p76 = por %p74, %p75
      %p77 = scmp.ne.s32.totalorder %s66, %s67
      %p78 = scmp.eq.s32.totalorder %s23, 0
      %p79 = por %p77, %p78
      %p80 = scmp.ne.s32.totalorder %s66, %s67
      %p81 = scmp.eq.s32.totalorder %s24, 1
      %p82 = por %p80, %p81
      %p84 = scmp.ne.s32.totalorder %s67, %s83
      %p85 = scmp.eq.s32.totalorder %s24, 0
      %p86 = por %p84, %p85
      %s87 = ssub.s32 %s25, %s37
      %p88 = scmp.eq.s32.totalorder %s87, 0
      %s90 = sadd.s32 %s89, 1
      %s91 = scalar_select %p88, %s89, %s90
      %p94 = pneg %p88
      %p95 = scmp.eq.s32.totalorder %s18, 1
      %p96 = por %p94, %p95
      %p97 = scmp.ne.s32.totalorder %s89, %s92
      %p98 = scmp.eq.s32.totalorder %s18, 0
      %p99 = por %p97, %p98
      %p100 = scmp.ne.s32.totalorder %s89, %s92
      %p101 = scmp.eq.s32.totalorder %s23, 1
      %p102 = por %p100, %p101
      %p103 = scmp.ne.s32.totalorder %s92, %s93
      %p104 = scmp.eq.s32.totalorder %s23, 0
      %p105 = por %p103, %p104
      %p106 = scmp.ne.s32.totalorder %s92, %s93
      %p107 = scmp.eq.s32.totalorder %s24, 1
      %p108 = por %p106, %p107
      %p110 = scmp.ne.s32.totalorder %s93, %s109
      %p111 = scmp.eq.s32.totalorder %s24, 0
      %p112 = por %p110, %p111
      %s114 = sadd.s32 %s113, 1
      %p117 = scmp.eq.s32.totalorder %s18, 1
      %p118 = scmp.ne.s32.totalorder %s113, %s115
      %p119 = scmp.eq.s32.totalorder %s18, 0
      %p120 = por %p118, %p119
      %p121 = scmp.ne.s32.totalorder %s113, %s115
      %p122 = scmp.eq.s32.totalorder %s23, 1
      %p123 = por %p121, %p122
      %p124 = scmp.ne.s32.totalorder %s115, %s116
      %p125 = scmp.eq.s32.totalorder %s23, 0
      %p126 = por %p124, %p125
      %p127 = scmp.ne.s32.totalorder %s115, %s116
      %p128 = scmp.eq.s32.totalorder %s24, 1
      %p129 = por %p127, %p128
      %p131 = scmp.ne.s32.totalorder %s116, %s130
      %p132 = scmp.eq.s32.totalorder %s24, 0
      %p133 = por %p131, %p132
      %s135 = sadd.s32 %s134, 1
      %p138 = scmp.eq.s32.totalorder %s18, 1
      %p139 = scmp.ne.s32.totalorder %s134, %s136
      %p140 = scmp.eq.s32.totalorder %s18, 0
      %p141 = por %p139, %p140
      %p142 = scmp.ne.s32.totalorder %s134, %s136
      %p143 = scmp.eq.s32.totalorder %s23, 1
      %p144 = por %p142, %p143
      %p145 = scmp.ne.s32.totalorder %s136, %s137
      %p146 = scmp.eq.s32.totalorder %s23, 0
      %p147 = por %p145, %p146
      %p148 = scmp.ne.s32.totalorder %s136, %s137
      %p149 = scmp.eq.s32.totalorder %s24, 1
      %p150 = por %p148, %p149
      %p152 = scmp.ne.s32.totalorder %s137, %s151
      %p153 = scmp.eq.s32.totalorder %s24, 0
      %p154 = por %p152, %p153
      %s156 = sadd.s32 %s155, 1
      %p159 = scmp.eq.s32.totalorder %s18, 1
      %p160 = scmp.ne.s32.totalorder %s155, %s157
      %p161 = scmp.eq.s32.totalorder %s18, 0
      %p162 = por %p160, %p161
      %p163 = scmp.ne.s32.totalorder %s155, %s157
      %p164 = scmp.eq.s32.totalorder %s23, 1
      %p165 = por %p163, %p164
      %p166 = scmp.ne.s32.totalorder %s157, %s158
      %p167 = scmp.eq.s32.totalorder %s23, 0
      %p168 = por %p166, %p167
      %p169 = scmp.ne.s32.totalorder %s157, %s158
      %p170 = scmp.eq.s32.totalorder %s24, 1
      %p171 = por %p169, %p170
      %p173 = scmp.ne.s32.totalorder %s158, %s172
      %p174 = scmp.eq.s32.totalorder %s24, 0
      %p175 = por %p173, %p174
      %s177 = sadd.s32 %s176, 1
      %p180 = scmp.eq.s32.totalorder %s18, 1
      %p181 = scmp.ne.s32.totalorder %s176, %s178
      %p182 = scmp.eq.s32.totalorder %s18, 0
      %p183 = por %p181, %p182
      %p184 = scmp.ne.s32.totalorder %s176, %s178
      %p185 = scmp.eq.s32.totalorder %s23, 1
      %p186 = por %p184, %p185
      %p187 = scmp.ne.s32.totalorder %s178, %s179
      %p188 = scmp.eq.s32.totalorder %s23, 0
      %p189 = por %p187, %p188
      %p190 = scmp.ne.s32.totalorder %s178, %s179
      %p191 = scmp.eq.s32.totalorder %s24, 1
      %p192 = por %p190, %p191
      %p194 = scmp.ne.s32.totalorder %s179, %s193
      %p195 = scmp.eq.s32.totalorder %s24, 0
      %p196 = por %p194, %p195
      %s198 = sadd.s32 %s197, 1
      %p201 = scmp.eq.s32.totalorder %s18, 1
      %p202 = scmp.ne.s32.totalorder %s197, %s199
      %p203 = scmp.eq.s32.totalorder %s18, 0
      %p204 = por %p202, %p203
      %p205 = scmp.ne.s32.totalorder %s197, %s199
      %p206 = scmp.eq.s32.totalorder %s23, 1
      %p207 = por %p205, %p206
      %p208 = scmp.ne.s32.totalorder %s199, %s200
      %p209 = scmp.eq.s32.totalorder %s23, 0
      %p210 = por %p208, %p209
      %p211 = scmp.ne.s32.totalorder %s199, %s200
      %p212 = scmp.eq.s32.totalorder %s24, 1
      %p213 = por %p211, %p212
      %p215 = scmp.ne.s32.totalorder %s200, %s214
      %p216 = scmp.eq.s32.totalorder %s24, 0
      %p217 = por %p215, %p216
      %s218 = ssub.s32 %s25, %s37
      %s219 = ssub.s32 %s26, %s33
      %s220 = sor.u32 %s218, %s219
      %p221 = scmp.eq.s32.totalorder %s220, 0
      %s223 = sadd.s32 %s222, 1
      %s224 = scalar_select %p221, %s222, %s223
      %p227 = pneg %p221
      %p228 = scmp.eq.s32.totalorder %s18, 1
      %p229 = por %p227, %p228
      %p230 = scmp.ne.s32.totalorder %s222, %s225
      %p231 = scmp.eq.s32.totalorder %s18, 0
      %p232 = por %p230, %p231
      %p233 = scmp.ne.s32.totalorder %s222, %s225
      %p234 = scmp.eq.s32.totalorder %s23, 1
      %p235 = por %p233, %p234
      %p236 = scmp.ne.s32.totalorder %s225, %s226
      %p237 = scmp.eq.s32.totalorder %s23, 0
      %p238 = por %p236, %p237
      %p239 = scmp.ne.s32.totalorder %s225, %s226
      %p240 = scmp.eq.s32.totalorder %s24, 1
      %p241 = por %p239, %p240
      %p243 = scmp.ne.s32.totalorder %s226, %s242
      %p244 = scmp.eq.s32.totalorder %s24, 0
      %p245 = por %p243, %p244
      %p246 = scmp.le.s32.totalorder 1, %s18
      %p247 = scmp.lt.s32.totalorder %s18, 3
      %p248 = pnand %p246, %p247
      %p249 = pneg %p248
      // Predicated region
      $region9: #{tpu_custom_call.1} parent=5 // pred_check
        _
      $region10: #{tpu_custom_call.1} parent=5 // pred_check_branch
        %251 = sbr.rel (%p248) target = $region12
      $region11: #{tpu_custom_call.1} parent=5 // pred_region
        %s252 = ssub.s32 %s18, 1
        // Predicated region
        $region13: #{tpu_custom_call.1} parent=11 // pred_check
          %p253 = pneg %p51
        $region14: #{tpu_custom_call.1} parent=11 // pred_check_branch
          %255 = sbr.rel (%p253) target = $region16
        $region15: #{tpu_custom_call.1} parent=11 // pred_region
          _
        $region16: #{tpu_custom_call.1} parent=11 // pred_fallthru
          _
        // Predicated region
        $region17: #{tpu_custom_call.1} parent=11 // pred_check
          %p256 = pneg %p126
        $region18: #{tpu_custom_call.1} parent=11 // pred_check_branch
          %258 = sbr.rel (%p256) target = $region20
        $region19: #{tpu_custom_call.1} parent=11 // pred_region
          _
        $region20: #{tpu_custom_call.1} parent=11 // pred_fallthru
          _
        // Predicated region
        $region21: #{tpu_custom_call.1} parent=11 // pred_check
          %p259 = pneg %p147
        $region22: #{tpu_custom_call.1} parent=11 // pred_check_branch
          %261 = sbr.rel (%p259) target = $region24
        $region23: #{tpu_custom_call.1} parent=11 // pred_region
          _
        $region24: #{tpu_custom_call.1} parent=11 // pred_fallthru
          _
        // Predicated region
        $region25: #{tpu_custom_call.1} parent=11 // pred_check
          %p262 = pneg %p168
        $region26: #{tpu_custom_call.1} parent=11 // pred_check_branch
          %264 = sbr.rel (%p262) target = $region28
        $region27: #{tpu_custom_call.1} parent=11 // pred_region
          _
        $region28: #{tpu_custom_call.1} parent=11 // pred_fallthru
          _
        // Predicated region
        $region29: #{tpu_custom_call.1} parent=11 // pred_check
          %p265 = pneg %p189
        $region30: #{tpu_custom_call.1} parent=11 // pred_check_branch
          %267 = sbr.rel (%p265) target = $region32
        $region31: #{tpu_custom_call.1} parent=11 // pred_region
          _
        $region32: #{tpu_custom_call.1} parent=11 // pred_fallthru
          _
        // Predicated region
        $region33: #{tpu_custom_call.1} parent=11 // pred_check
          %p268 = pneg %p210
        $region34: #{tpu_custom_call.1} parent=11 // pred_check_branch
          %270 = sbr.rel (%p268) target = $region36
        $region35: #{tpu_custom_call.1} parent=11 // pred_region
          _
        $region36: #{tpu_custom_call.1} parent=11 // pred_fallthru
          _
      $region12: #{tpu_custom_call.1} parent=5 // pred_fallthru
        _
      %p271 = scmp.lt.s32.totalorder %s18, 2
      // Predicated region
      $region37: #{tpu_custom_call.1} parent=5 // pred_check
        %p272 = pneg %p271
      $region38: #{tpu_custom_call.1} parent=5 // pred_check_branch
        %274 = sbr.rel (%p272) target = $region40
      $region39: #{tpu_custom_call.1} parent=5 // pred_region
        // Predicated region
        $region41: #{tpu_custom_call.1} parent=39 // pred_check
          %p275 = pneg %p73
        $region42: #{tpu_custom_call.1} parent=39 // pred_check_branch
          %277 = sbr.rel (%p275) target = $region44
        $region43: #{tpu_custom_call.1} parent=39 // pred_region
          %p278 = scmp.lt.s32.totalorder %s25, 1
          %s279 = scalar_select %p278, %s25, 1
          %p280 = scmp.lt.s32.totalorder %s26, 0
          %s281 = scalar_select %p280, %s26, 0
          %s282 = sadd.s32 %s281, %s279
          %s283 = smul.addr %s282, 8
          %s284 = scalar_lea.vmem %s1, %s283
        $region44: #{tpu_custom_call.1} parent=39 // pred_fallthru
          _
        // Predicated region
        $region45: #{tpu_custom_call.1} parent=39 // pred_check
          %p285 = pneg %p99
        $region46: #{tpu_custom_call.1} parent=39 // pred_check_branch
          %287 = sbr.rel (%p285) target = $region48
        $region47: #{tpu_custom_call.1} parent=39 // pred_region
          %p288 = scmp.lt.s32.totalorder %s25, 1
          %s289 = scalar_select %p288, %s25, 1
          %s290 = smul.addr %s289, 8
          %s291 = scalar_lea.vmem %s2, %s290
        $region48: #{tpu_custom_call.1} parent=39 // pred_fallthru
          _
      $region40: #{tpu_custom_call.1} parent=5 // pred_fallthru
        _
      %p292 = scmp.le.s32.totalorder 1, %s18
      %p293 = scmp.lt.s32.totalorder %s18, 3
      %p294 = pnand %p292, %p293
      %p295 = pneg %p294
      // Predicated region
      $region49: #{tpu_custom_call.1} parent=5 // pred_check
        _
      $region50: #{tpu_custom_call.1} parent=5 // pred_check_branch
        %297 = sbr.rel (%p294) target = $region52
      $region51: #{tpu_custom_call.1} parent=5 // pred_region
        %s298 = ssub.s32 %s18, 1
        %p299 = pneg %p51
        %p300 = pneg %p48
        %p301 = scmp.lt.s32.totalorder %s27, 1
        %s302 = scalar_select %p301, %s27, 1
        %p303 = scmp.lt.s32.totalorder %s28, 0
        %s304 = scalar_select %p303, %s28, 0
        %s305 = sadd.s32 %s304, %s302
        %s306 = smul.addr %s305, 8
        %s307 = scalar_lea.vmem %s1, %s306
        %p308 = pneg %p79
        %p309 = pneg %p76
        %p310 = scmp.lt.s32.totalorder %s27, 1
        %s311 = scalar_select %p310, %s27, 1
        %s312 = smul.addr %s311, 8
        %s313 = scalar_lea.vmem %s2, %s312
        %p314 = pneg %p105
        %p315 = pneg %p102
        %p316 = pneg %p126
        %p317 = pneg %p123
        %p318 = pneg %p147
        %p319 = pneg %p144
        %p320 = pneg %p168
        %p321 = pneg %p165
        %p322 = pneg %p189
        %p323 = pneg %p186
        %p324 = pneg %p210
        %p325 = pneg %p207
        %p326 = pneg %p238
        %p327 = pneg %p235
        %s328 = sand.u32 %s225, 1
        %s329 = scalar_lea.sflag [#allocation4], %s328
        %s330 = sand.u32 %s225, 1
        %s331 = smul.addr %s330, 8
        %s332 = scalar_lea.vmem [#allocation3], %s331
        %p333 = scmp.lt.s32.totalorder %s27, 1
        %s334 = scalar_select %p333, %s27, 1
        %p335 = scmp.lt.s32.totalorder %s28, 0
        %s336 = scalar_select %p335, %s28, 0
        %s337 = sadd.s32 %s336, %s334
        %s338 = smul.addr %s337, 8
        %s339 = scalar_lea.vmem %s1, %s338
        %p340 = scmp.lt.s32.totalorder %s27, 1
        %s341 = scalar_select %p340, %s27, 1
        %s342 = smul.addr %s341, 8
        %s343 = scalar_lea.vmem %s2, %s342
        %v345 = vld [vmem:[%s339] sm:$0xff]
        %v346 = vpack.c.bf16 %v345, %v345
        %v347 = vld [vmem:[%s343] sm:$0xff]
        %v348 = vpack.c.bf16 %v347, %v347
        %v349 = vld [vmem:[%s3] sm:$0xf]
        %v350 = vld [vmem:[%s3 + $0x4] sm:$0xf]
        %v351 = vld [vmem:[%s3 + $0x8] sm:$0xf]
        %v352 = vld [vmem:[%s3 + $0xc] sm:$0xf]
        %v357 = vunpack.c.l.b16 %v349
        %v358 = vunpack.c.l.b16 %v350
        %v359 = vunpack.c.l.b16 %v351
        %v360 = vunpack.c.l.b16 %v352
        %v361 = vpack.c.b16 %v358, %v357
        %v362 = vpack.c.b16 %v360, %v359
        %vm365 = vcmask 261120
        %v367 = vsel %vm365, %v346, 0
        %369 = vmatprep.subr.bf16.mxu0 0
        %370 = vmatpush1.bf16.msra.mxu0 %v361
        %371 = vmatprep.subr.bf16.mxu0 0
        %372 = vmatpush1.bf16.msra.mxu0 %v362
        %373 = vmatprep.subr.bf16.mxu0 0
        %374 = vmatpush1.bf16.msra.mxu0 0
        %375 = vmatprep.subr.bf16.mxu0 0
        %376 = vmatpush1.bf16.msra.mxu0 0
        %377 = vmatprep.subr.bf16.mxu0 0
        %378 = vmatpush1.bf16.msra.mxu0 0
        %379 = vmatprep.subr.bf16.mxu0 0
        %380 = vmatpush1.bf16.msra.mxu0 0
        %381 = vmatprep.subr.bf16.mxu0 0
        %382 = vmatpush1.bf16.msra.mxu0 0
        %383 = vmatprep.subr.bf16.mxu0 0
        %384 = vmatpush1.bf16.msra.mxu0 0
        %385 = vmatprep.subr.bf16.mxu0 0
        %386 = vmatpush1.bf16.msra.mxu0 0
        %387 = vmatprep.subr.bf16.mxu0 0
        %388 = vmatpush1.bf16.msra.mxu0 0
        %389 = vmatprep.subr.bf16.mxu0 0
        %390 = vmatpush1.bf16.msra.mxu0 0
        %391 = vmatprep.subr.bf16.mxu0 0
        %392 = vmatpush1.bf16.msra.mxu0 0
        %393 = vmatprep.subr.bf16.mxu0 0
        %394 = vmatpush1.bf16.msra.mxu0 0
        %395 = vmatprep.subr.bf16.mxu0 0
        %396 = vmatpush1.bf16.msra.mxu0 0
        %397 = vmatprep.subr.bf16.mxu0 0
        %398 = vmatpush1.bf16.msra.mxu0 0
        %399 = vmatprep.subr.bf16.mxu0 0
        %400 = vmatpush1.bf16.msra.mxu0 0
        %401 = vmatprep.mubr.bf16.mxu0 0
        %402 = vmatmul.mubr.bf16.gmra.mrb[0].mxu0 %v367
        %v403 = vpop.f32.mrb[0].mxu0
        %v404 = vadd.f32 0.0, %v403
        %v405 = vpop.f32.mrb[0].mxu0
        %v406 = vpop.f32.mrb[0].mxu0
        %v407 = vpop.f32.mrb[0].mxu0
        %408 = vdwg.mxu0
        %v409 = vld [vmem:[%s4] sm:$0xf]
        %v410 = vld [vmem:[%s4 + $0x4] sm:$0xf]
        %v411 = vld [vmem:[%s4 + $0x8] sm:$0xf]
        %v412 = vld [vmem:[%s4 + $0xc] sm:$0xf]
        %v417 = vunpack.c.l.b16 %v409
        %v418 = vunpack.c.l.b16 %v410
        %v419 = vunpack.c.l.b16 %v411
        %v420 = vunpack.c.l.b16 %v412
        %v421 = vpack.c.b16 %v418, %v417
        %v422 = vpack.c.b16 %v420, %v419
        %425 = vmatprep.subr.bf16.mxu0 0
        %426 = vmatpush1.bf16.msra.mxu0 %v421
        %427 = vmatprep.subr.bf16.mxu0 0
        %428 = vmatpush1.bf16.msra.mxu0 %v422
        %429 = vmatprep.subr.bf16.mxu0 0
        %430 = vmatpush1.bf16.msra.mxu0 0
        %431 = vmatprep.subr.bf16.mxu0 0
        %432 = vmatpush1.bf16.msra.mxu0 0
        %433 = vmatprep.subr.bf16.mxu0 0
        %434 = vmatpush1.bf16.msra.mxu0 0
        %435 = vmatprep.subr.bf16.mxu0 0
        %436 = vmatpush1.bf16.msra.mxu0 0
        %437 = vmatprep.subr.bf16.mxu0 0
        %438 = vmatpush1.bf16.msra.mxu0 0
        %439 = vmatprep.subr.bf16.mxu0 0
        %440 = vmatpush1.bf16.msra.mxu0 0
        %441 = vmatprep.subr.bf16.mxu0 0
        %442 = vmatpush1.bf16.msra.mxu0 0
        %443 = vmatprep.subr.bf16.mxu0 0
        %444 = vmatpush1.bf16.msra.mxu0 0
        %445 = vmatprep.subr.bf16.mxu0 0
        %446 = vmatpush1.bf16.msra.mxu0 0
        %447 = vmatprep.subr.bf16.mxu0 0
        %448 = vmatpush1.bf16.msra.mxu0 0
        %449 = vmatprep.subr.bf16.mxu0 0
        %450 = vmatpush1.bf16.msra.mxu0 0
        %451 = vmatprep.subr.bf16.mxu0 0
        %452 = vmatpush1.bf16.msra.mxu0 0
        %453 = vmatprep.subr.bf16.mxu0 0
        %454 = vmatpush1.bf16.msra.mxu0 0
        %455 = vmatprep.subr.bf16.mxu0 0
        %456 = vmatpush1.bf16.msra.mxu0 0
        %457 = vmatprep.mubr.bf16.mxu0 0
        %458 = vmatmul.mubr.bf16.gmra.mrb[0].mxu0 %v367
        %v459 = vpop.f32.mrb[0].mxu0
        %v460 = vadd.f32 0.0, %v459
        %v461 = vpop.f32.mrb[0].mxu0
        %v462 = vpop.f32.mrb[0].mxu0
        %v463 = vpop.f32.mrb[0].mxu0
        %464 = vdwg.mxu0
        %v465 = vld [vmem:[%s5] sm:$0xf]
        %v466 = vld [vmem:[%s5 + $0x4] sm:$0xf]
        %v467 = vld [vmem:[%s5 + $0x8] sm:$0xf]
        %v468 = vld [vmem:[%s5 + $0xc] sm:$0xf]
        %v473 = vunpack.c.l.b16 %v465
        %v474 = vunpack.c.l.b16 %v466
        %v475 = vunpack.c.l.b16 %v467
        %v476 = vunpack.c.l.b16 %v468
        %v477 = vpack.c.b16 %v474, %v473
        %v478 = vpack.c.b16 %v476, %v475
        %v482 = vsel %vm365, %v348, 0
        %484 = vmatprep.subr.bf16.mxu0 0
        %485 = vmatpush1.bf16.msra.mxu0 %v477
        %486 = vmatprep.subr.bf16.mxu0 0
        %487 = vmatpush1.bf16.msra.mxu0 %v478
        %488 = vmatprep.subr.bf16.mxu0 0
        %489 = vmatpush1.bf16.msra.mxu0 0
        %490 = vmatprep.subr.bf16.mxu0 0
        %491 = vmatpush1.bf16.msra.mxu0 0
        %492 = vmatprep.subr.bf16.mxu0 0
        %493 = vmatpush1.bf16.msra.mxu0 0
        %494 = vmatprep.subr.bf16.mxu0 0
        %495 = vmatpush1.bf16.msra.mxu0 0
        %496 = vmatprep.subr.bf16.mxu0 0
        %497 = vmatpush1.bf16.msra.mxu0 0
        %498 = vmatprep.subr.bf16.mxu0 0
        %499 = vmatpush1.bf16.msra.mxu0 0
        %500 = vmatprep.subr.bf16.mxu0 0
        %501 = vmatpush1.bf16.msra.mxu0 0
        %502 = vmatprep.subr.bf16.mxu0 0
        %503 = vmatpush1.bf16.msra.mxu0 0
        %504 = vmatprep.subr.bf16.mxu0 0
        %505 = vmatpush1.bf16.msra.mxu0 0
        %506 = vmatprep.subr.bf16.mxu0 0
        %507 = vmatpush1.bf16.msra.mxu0 0
        %508 = vmatprep.subr.bf16.mxu0 0
        %509 = vmatpush1.bf16.msra.mxu0 0
        %510 = vmatprep.subr.bf16.mxu0 0
        %511 = vmatpush1.bf16.msra.mxu0 0
        %512 = vmatprep.subr.bf16.mxu0 0
        %513 = vmatpush1.bf16.msra.mxu0 0
        %514 = vmatprep.subr.bf16.mxu0 0
        %515 = vmatpush1.bf16.msra.mxu0 0
        %516 = vmatprep.mubr.bf16.mxu0 0
        %517 = vmatmul.mubr.bf16.gmra.mrb[0].mxu0 %v482
        %v518 = vpop.f32.mrb[0].mxu0
        %v519 = vadd.f32 0.0, %v518
        %v520 = vpop.f32.mrb[0].mxu0
        %v521 = vpop.f32.mrb[0].mxu0
        %v522 = vpop.f32.mrb[0].mxu0
        %523 = vdwg.mxu0
        %v524 = vld [vmem:[%s6] sm:$0xf]
        %v525 = vld [vmem:[%s6 + $0x4] sm:$0xf]
        %v526 = vld [vmem:[%s6 + $0x8] sm:$0xf]
        %v527 = vld [vmem:[%s6 + $0xc] sm:$0xf]
        %v532 = vunpack.c.l.b16 %v524
        %v533 = vunpack.c.l.b16 %v525
        %v534 = vunpack.c.l.b16 %v526
        %v535 = vunpack.c.l.b16 %v527
        %v536 = vpack.c.b16 %v533, %v532
        %v537 = vpack.c.b16 %v535, %v534
        %540 = vmatprep.subr.bf16.mxu0 0
        %541 = vmatpush1.bf16.msra.mxu0 %v536
        %542 = vmatprep.subr.bf16.mxu0 0
        %543 = vmatpush1.bf16.msra.mxu0 %v537
        %544 = vmatprep.subr.bf16.mxu0 0
        %545 = vmatpush1.bf16.msra.mxu0 0
        %546 = vmatprep.subr.bf16.mxu0 0
        %547 = vmatpush1.bf16.msra.mxu0 0
        %548 = vmatprep.subr.bf16.mxu0 0
        %549 = vmatpush1.bf16.msra.mxu0 0
        %550 = vmatprep.subr.bf16.mxu0 0
        %551 = vmatpush1.bf16.msra.mxu0 0
        %552 = vmatprep.subr.bf16.mxu0 0
        %553 = vmatpush1.bf16.msra.mxu0 0
        %554 = vmatprep.subr.bf16.mxu0 0
        %555 = vmatpush1.bf16.msra.mxu0 0
        %556 = vmatprep.subr.bf16.mxu0 0
        %557 = vmatpush1.bf16.msra.mxu0 0
        %558 = vmatprep.subr.bf16.mxu0 0
        %559 = vmatpush1.bf16.msra.mxu0 0
        %560 = vmatprep.subr.bf16.mxu0 0
        %561 = vmatpush1.bf16.msra.mxu0 0
        %562 = vmatprep.subr.bf16.mxu0 0
        %563 = vmatpush1.bf16.msra.mxu0 0
        %564 = vmatprep.subr.bf16.mxu0 0
        %565 = vmatpush1.bf16.msra.mxu0 0
        %566 = vmatprep.subr.bf16.mxu0 0
        %567 = vmatpush1.bf16.msra.mxu0 0
        %568 = vmatprep.subr.bf16.mxu0 0
        %569 = vmatpush1.bf16.msra.mxu0 0
        %570 = vmatprep.subr.bf16.mxu0 0
        %571 = vmatpush1.bf16.msra.mxu0 0
        %572 = vmatprep.mubr.bf16.mxu0 0
        %573 = vmatmul.mubr.bf16.gmra.mrb[0].mxu0 %v482
        %v574 = vpop.f32.mrb[0].mxu0
        %v575 = vadd.f32 0.0, %v574
        %v576 = vpop.f32.mrb[0].mxu0
        %v577 = vpop.f32.mrb[0].mxu0
        %v578 = vpop.f32.mrb[0].mxu0
        %579 = vdwg.mxu0
        %v580 = vld [vmem:[%s7] sm:$0xf]
        %v581 = vld [vmem:[%s7 + $0x4] sm:$0xf]
        %v582 = vld [vmem:[%s7 + $0x8] sm:$0xf]
        %v583 = vld [vmem:[%s7 + $0xc] sm:$0xf]
        %v588 = vunpack.c.l.b16 %v580
        %v589 = vunpack.c.l.b16 %v581
        %v590 = vunpack.c.l.b16 %v582
        %v591 = vunpack.c.l.b16 %v583
        %v592 = vpack.c.b16 %v589, %v588
        %v593 = vpack.c.b16 %v591, %v590
        %596 = vmatprep.subr.bf16.mxu0 0
        %597 = vmatpush1.bf16.msra.mxu0 %v592
        %598 = vmatprep.subr.bf16.mxu0 0
        %599 = vmatpush1.bf16.msra.mxu0 %v593
        %600 = vmatprep.subr.bf16.mxu0 0
        %601 = vmatpush1.bf16.msra.mxu0 0
        %602 = vmatprep.subr.bf16.mxu0 0
        %603 = vmatpush1.bf16.msra.mxu0 0
        %604 = vmatprep.subr.bf16.mxu0 0
        %605 = vmatpush1.bf16.msra.mxu0 0
        %606 = vmatprep.subr.bf16.mxu0 0
        %607 = vmatpush1.bf16.msra.mxu0 0
        %608 = vmatprep.subr.bf16.mxu0 0
        %609 = vmatpush1.bf16.msra.mxu0 0
        %610 = vmatprep.subr.bf16.mxu0 0
        %611 = vmatpush1.bf16.msra.mxu0 0
        %612 = vmatprep.subr.bf16.mxu0 0
        %613 = vmatpush1.bf16.msra.mxu0 0
        %614 = vmatprep.subr.bf16.mxu0 0
        %615 = vmatpush1.bf16.msra.mxu0 0
        %616 = vmatprep.subr.bf16.mxu0 0
        %617 = vmatpush1.bf16.msra.mxu0 0
        %618 = vmatprep.subr.bf16.mxu0 0
        %619 = vmatpush1.bf16.msra.mxu0 0
        %620 = vmatprep.subr.bf16.mxu0 0
        %621 = vmatpush1.bf16.msra.mxu0 0
        %622 = vmatprep.subr.bf16.mxu0 0
        %623 = vmatpush1.bf16.msra.mxu0 0
        %624 = vmatprep.subr.bf16.mxu0 0
        %625 = vmatpush1.bf16.msra.mxu0 0
        %626 = vmatprep.subr.bf16.mxu0 0
        %627 = vmatpush1.bf16.msra.mxu0 0
        %628 = vmatprep.mubr.bf16.mxu0 0
        %629 = vmatmul.mubr.bf16.gmra.mrb[0].mxu0 %v482
        %v630 = vpop.f32.mrb[0].mxu0
        %v631 = vadd.f32 0.0, %v630
        %v632 = vpop.f32.mrb[0].mxu0
        %v633 = vpop.f32.mrb[0].mxu0
        %v634 = vpop.f32.mrb[0].mxu0
        %635 = vdwg.mxu0
        %v636 = vpack.c.bf16 %v404, %v404
        %v637 = vpack.c.bf16 %v519, %v519
        %vm638 = vcmask 130048
        %v640 = vsel %vm638, %v636, 0
        %v643 = vsel %vm638, %v637, 0
        %645 = vmatprep.subr.bf16.mxu0 0
        %646 = vmatpush1.bf16.xpose.msra.mxu0 %v643
        %647 = vmatprep.subr.bf16.mxu0 0
        %648 = vmatpush1.bf16.xpose.msra.mxu0 0
        %649 = vmatprep.subr.bf16.mxu0 0
        %650 = vmatpush1.bf16.xpose.msra.mxu0 0
        %651 = vmatprep.subr.bf16.mxu0 0
        %652 = vmatpush1.bf16.xpose.msra.mxu0 0
        %653 = vmatprep.subr.bf16.mxu0 0
        %654 = vmatpush1.bf16.xpose.msra.mxu0 0
        %655 = vmatprep.subr.bf16.mxu0 0
        %656 = vmatpush1.bf16.xpose.msra.mxu0 0
        %657 = vmatprep.subr.bf16.mxu0 0
        %658 = vmatpush1.bf16.xpose.msra.mxu0 0
        %659 = vmatprep.subr.bf16.mxu0 0
        %660 = vmatpush1.bf16.xpose.msra.mxu0 0
        %661 = vmatprep.subr.bf16.mxu0 0
        %662 = vmatpush1.bf16.xpose.msra.mxu0 0
        %663 = vmatprep.subr.bf16.mxu0 0
        %664 = vmatpush1.bf16.xpose.msra.mxu0 0
        %665 = vmatprep.subr.bf16.mxu0 0
        %666 = vmatpush1.bf16.xpose.msra.mxu0 0
        %667 = vmatprep.subr.bf16.mxu0 0
        %668 = vmatpush1.bf16.xpose.msra.mxu0 0
        %669 = vmatprep.subr.bf16.mxu0 0
        %670 = vmatpush1.bf16.xpose.msra.mxu0 0
        %671 = vmatprep.subr.bf16.mxu0 0
        %672 = vmatpush1.bf16.xpose.msra.mxu0 0
        %673 = vmatprep.subr.bf16.mxu0 0
        %674 = vmatpush1.bf16.xpose.msra.mxu0 0
        %675 = vmatprep.subr.bf16.mxu0 0
        %676 = vmatpush1.bf16.xpose.msra.mxu0 0
        %677 = vmatprep.mubr.bf16.mxu0 0
        %678 = vmatmul.mubr.bf16.gmra.mrb[0].mxu0 %v640
        %v679 = vpop.f32.mrb[0].mxu0
        %v680 = vadd.f32 0.0, %v679
        %v681 = vpop.f32.mrb[0].mxu0
        %v682 = vpop.f32.mrb[0].mxu0
        %v683 = vpop.f32.mrb[0].mxu0
        %684 = vdwg.mxu0
        %v685 = vpack.c.bf16 %v460, %v460
        %v686 = vpack.c.bf16 %v575, %v575
        %v688 = vsel %vm638, %v685, 0
        %v691 = vsel %vm638, %v686, 0
        %693 = vmatprep.subr.bf16.mxu0 0
        %694 = vmatpush1.bf16.xpose.msra.mxu0 %v691
        %695 = vmatprep.subr.bf16.mxu0 0
        %696 = vmatpush1.bf16.xpose.msra.mxu0 0
        %697 = vmatprep.subr.bf16.mxu0 0
        %698 = vmatpush1.bf16.xpose.msra.mxu0 0
        %699 = vmatprep.subr.bf16.mxu0 0
        %700 = vmatpush1.bf16.xpose.msra.mxu0 0
        %701 = vmatprep.subr.bf16.mxu0 0
        %702 = vmatpush1.bf16.xpose.msra.mxu0 0
        %703 = vmatprep.subr.bf16.mxu0 0
        %704 = vmatpush1.bf16.xpose.msra.mxu0 0
        %705 = vmatprep.subr.bf16.mxu0 0
        %706 = vmatpush1.bf16.xpose.msra.mxu0 0
        %707 = vmatprep.subr.bf16.mxu0 0
        %708 = vmatpush1.bf16.xpose.msra.mxu0 0
        %709 = vmatprep.subr.bf16.mxu0 0
        %710 = vmatpush1.bf16.xpose.msra.mxu0 0
        %711 = vmatprep.subr.bf16.mxu0 0
        %712 = vmatpush1.bf16.xpose.msra.mxu0 0
        %713 = vmatprep.subr.bf16.mxu0 0
        %714 = vmatpush1.bf16.xpose.msra.mxu0 0
        %715 = vmatprep.subr.bf16.mxu0 0
        %716 = vmatpush1.bf16.xpose.msra.mxu0 0
        %717 = vmatprep.subr.bf16.mxu0 0
        %718 = vmatpush1.bf16.xpose.msra.mxu0 0
        %719 = vmatprep.subr.bf16.mxu0 0
        %720 = vmatpush1.bf16.xpose.msra.mxu0 0
        %721 = vmatprep.subr.bf16.mxu0 0
        %722 = vmatpush1.bf16.xpose.msra.mxu0 0
        %723 = vmatprep.subr.bf16.mxu0 0
        %724 = vmatpush1.bf16.xpose.msra.mxu0 0
        %725 = vmatprep.mubr.bf16.mxu0 0
        %726 = vmatmul.mubr.bf16.gmra.mrb[0].mxu0 %v688
        %v727 = vpop.f32.mrb[0].mxu0
        %v728 = vadd.f32 0.0, %v727
        %v729 = vpop.f32.mrb[0].mxu0
        %v730 = vpop.f32.mrb[0].mxu0
        %v731 = vpop.f32.mrb[0].mxu0
        %732 = vdwg.mxu0
        %s733 = smul.u32 %s28, 8
        %v734 = vlaneseq
        %v735 = vshrl.u32 %v734, 7
        %v736 = vstv %s733
        %v737 = vadd.s32 %v735, %v736
        %v738 = vlaneseq
        %v739 = vand.u32 %v738, 127
        %vm740 = vcmp.le.s32.totalorder %v739, %v737
        %v741 = vsel %vm740, %v680, -inf
        %v742 = vsel %vm740, %v728, -inf
        %s743 = sld [smem:[#allocation2]]
        %vm744 = vcmask 64512
        %v745 = vsel %vm744, %v741, -inf
        %746 = vmax.xlane.f32.xlu0 %v745
        %v747 = vpop.xlane.xlu0 %746
        %v748 = vsub.f32 %v741, %v747
        %v749 = vmul.f32 %v748, 1.442695
        %v750 = vpow.pop %v749
        %v751 = vsel %vm744, %v750, 0.0
        %752 = vadd.xlane.f32.xlu0 %v751
        %v753 = vpop.xlane.xlu0 %752
        %v754 = vrcp.pop %v753
        %v755 = vmul.f32 %v750, %v754
        %v756 = vsel %vm744, %v742, -inf
        %757 = vmax.xlane.f32.xlu0 %v756
        %v758 = vpop.xlane.xlu0 %757
        %v759 = vsub.f32 %v742, %v758
        %v760 = vmul.f32 %v759, 1.442695
        %v761 = vpow.pop %v760
        %v762 = vsel %vm744, %v761, 0.0
        %763 = vadd.xlane.f32.xlu0 %v762
        %v764 = vpop.xlane.xlu0 %763
        %v765 = vrcp.pop %v764
        %v766 = vmul.f32 %v761, %v765
        %v767 = vstv %s743
        %v768 = vmul.f32 %v767, %v766
        %v769 = vsub.f32 %v755, %v768
        %v770 = vpack.c.bf16 %v769, %v769
        %v771 = vpack.c.bf16 %v631, %v631
        %v773 = vsel %vm744, %v770, 0
        %vm775 = vcmask 1043456
        %v777 = vsel %vm775, %v771, 0
        %779 = vmatprep.subr.bf16.mxu0 0
        %780 = vmatpush1.bf16.msra.mxu0 %v777
        %781 = vmatprep.subr.bf16.mxu0 0
        %782 = vmatpush1.bf16.msra.mxu0 0
        %783 = vmatprep.subr.bf16.mxu0 0
        %784 = vmatpush1.bf16.msra.mxu0 0
        %785 = vmatprep.subr.bf16.mxu0 0
        %786 = vmatpush1.bf16.msra.mxu0 0
        %787 = vmatprep.subr.bf16.mxu0 0
        %788 = vmatpush1.bf16.msra.mxu0 0
        %789 = vmatprep.subr.bf16.mxu0 0
        %790 = vmatpush1.bf16.msra.mxu0 0
        %791 = vmatprep.subr.bf16.mxu0 0
        %792 = vmatpush1.bf16.msra.mxu0 0
        %793 = vmatprep.subr.bf16.mxu0 0
        %794 = vmatpush1.bf16.msra.mxu0 0
        %795 = vmatprep.subr.bf16.mxu0 0
        %796 = vmatpush1.bf16.msra.mxu0 0
        %797 = vmatprep.subr.bf16.mxu0 0
        %798 = vmatpush1.bf16.msra.mxu0 0
        %799 = vmatprep.subr.bf16.mxu0 0
        %800 = vmatpush1.bf16.msra.mxu0 0
        %801 = vmatprep.subr.bf16.mxu0 0
        %802 = vmatpush1.bf16.msra.mxu0 0
        %803 = vmatprep.subr.bf16.mxu0 0
        %804 = vmatpush1.bf16.msra.mxu0 0
        %805 = vmatprep.subr.bf16.mxu0 0
        %806 = vmatpush1.bf16.msra.mxu0 0
        %807 = vmatprep.subr.bf16.mxu0 0
        %808 = vmatpush1.bf16.msra.mxu0 0
        %809 = vmatprep.subr.bf16.mxu0 0
        %810 = vmatpush1.bf16.msra.mxu0 0
        %811 = vmatprep.mubr.bf16.mxu0 0
        %812 = vmatmul.mubr.bf16.gmra.mrb[0].mxu0 %v773
        %v813 = vpop.f32.mrb[0].mxu0
        %v814 = vadd.f32 0.0, %v813
        %v815 = vpop.f32.mrb[0].mxu0
        %v816 = vpop.f32.mrb[0].mxu0
        %v817 = vpop.f32.mrb[0].mxu0
        %818 = vdwg.mxu0
        %819 = vst.msk [vmem:[%s332] sm:$0xff] %vm365, %v814
        %s820 = sand.u32 %s225, 1
        %s821 = scalar_lea.sflag [#allocation4], %s820
        %s822 = sand.u32 %s225, 1
        %s823 = smul.addr %s822, 8
        %s824 = scalar_lea.vmem [#allocation3], %s823
        // Predicated region
        $region53: #{tpu_custom_call.1} parent=51 // pred_check
          %p825 = pneg %p235
        $region54: #{tpu_custom_call.1} parent=51 // pred_check_branch
          %827 = sbr.rel (%p825) target = $region56
        $region55: #{tpu_custom_call.1} parent=51 // pred_region
          %s829 = ssub.s32 128, 128
          %830 = vsyncadd %s821, %s829
          %s831 = sadd.s32 %s28, %s27
          %s832 = smul.addr %s831, 128
          %s833 = scalar_lea.hbm %s8, %s832
          %s835 = sshll.u32 %s824, 4
          %s836 = int_to_ptr.vmem [resolvable:$true] %s835
          %838 = dma.vmem_to_hbm [thread:$0]  %s836, 128, %s833, %s821
        $region56: #{tpu_custom_call.1} parent=51 // pred_fallthru
          _
      $region52: #{tpu_custom_call.1} parent=5 // pred_fallthru
        _
      %p839 = scmp.le.s32.totalorder 2, %s18
      // Predicated region
      $region57: #{tpu_custom_call.1} parent=5 // pred_check
        %p840 = pneg %p839
      $region58: #{tpu_custom_call.1} parent=5 // pred_check_branch
        %842 = sbr.rel (%p840) target = $region60
      $region59: #{tpu_custom_call.1} parent=5 // pred_region
        %s843 = ssub.s32 %s18, 2
        // Predicated region
        $region61: #{tpu_custom_call.1} parent=59 // pred_check
          %p844 = pneg %p241
        $region62: #{tpu_custom_call.1} parent=59 // pred_check_branch
          %846 = sbr.rel (%p844) target = $region64
        $region63: #{tpu_custom_call.1} parent=59 // pred_region
          %s847 = sand.u32 %s226, 1
          %s848 = scalar_lea.sflag [#allocation4], %s847
          %s849 = sand.u32 %s226, 1
          %s850 = smul.addr %s849, 8
          %s851 = scalar_lea.vmem [#allocation3], %s850
          %852 = dma.done %s848, 128
        $region64: #{tpu_custom_call.1} parent=59 // pred_fallthru
          _
      $region60: #{tpu_custom_call.1} parent=5 // pred_fallthru
        _
    $region6: #{tpu_custom_call.1} parent=1 // loop_footer
      %s22 = sadd.s32 1, %s18
    $region7: #{tpu_custom_call.1} parent=1 // loop_footer_branch
      %17 = sbr.rel target = $region3
    $region8: #{tpu_custom_call.1} parent=1 // loop_exit
      _
    %853 = vsyncpa [#allocation4], 1
    %s854 = scalar_lea.sflag [#allocation4], 1
    %855 = vsyncpa %s854, 1

</llo_original>
